<compile_context>
chip_gen: v6e
topology: v6e:2x2x1
jax: 0.10.0
libtpu: 0.0.40
codegen_flags: <defaults>
</compile_context>

<pallas_src>
import functools
import math

import jax
import jax.numpy as jnp
import numpy as np
from jax import lax
from jax.experimental import pallas as pl
from jax.experimental.pallas import tpu as pltpu


def _residual_block_b_kernel(
    x_pad_ref,                  # (1, L + (k-1)*d, C)  causally left-padded input
    w1_ref, b1_ref,             # (k, C, C), (1, C)    conv1 per-tap weights + bias
    g1_ref, beta1_ref,          # (1, C), (1, C)       ln1 gamma / beta
    w2_ref, b2_ref,             # (k, C, C), (1, C)    conv2 per-tap weights + bias
    g2_ref, beta2_ref,          # (1, C), (1, C)       ln2 gamma / beta
    out_ref,                    # (1, L, C)
    h_pad_ref,                  # VMEM scratch (L + (k-1)*2d, C) f32
    *, kernel_size, dilation, seq_len, eps,
):
    k = kernel_size
    d = dilation
    L = seq_len
    C = out_ref.shape[-1]
    pad1 = (k - 1) * d
    pad2 = (k - 1) * 2 * d

    # ---------------- conv1: causal dilated conv as k shifted matmuls ----------------
    acc1 = jnp.zeros((L, C), jnp.float32) + b1_ref[...].astype(jnp.float32)
    for j in range(k):                       # k is tiny & static -> unrolled
        xj = x_pad_ref[0, pl.ds(j * d, L), :].astype(jnp.float32)
        acc1 = acc1 + jnp.dot(xj, w1_ref[j].astype(jnp.float32),
                              preferred_element_type=jnp.float32)

    # ---------------- LayerNorm(ln1) over channels + ReLU ----------------
    mean1 = jnp.mean(acc1, axis=-1, keepdims=True)
    cent1 = acc1 - mean1
    var1 = jnp.mean(cent1 * cent1, axis=-1, keepdims=True)
    h1 = cent1 * lax.rsqrt(var1 + eps)
    h1 = h1 * g1_ref[...].astype(jnp.float32) + beta1_ref[...].astype(jnp.float32)
    h1 = jnp.maximum(h1, 0.0)

    # ---------------- causal left-pad of h1 for conv2 (dilation 2d) ----------------
    # Zero the pad region every step (cheap) so we never depend on scratch state.
    h_pad_ref[pl.ds(0, pad2), :] = jnp.zeros((pad2, C), jnp.float32)
    h_pad_ref[pl.ds(pad2, L), :] = h1

    # ---------------- conv2 ----------------
    acc2 = jnp.zeros((L, C), jnp.float32) + b2_ref[...].astype(jnp.float32)
    for j in range(k):
        hj = h_pad_ref[pl.ds(j * 2 * d, L), :]
        acc2 = acc2 + jnp.dot(hj, w2_ref[j].astype(jnp.float32),
                              preferred_element_type=jnp.float32)

    # ---------------- LayerNorm(ln2) + ReLU + residual ----------------
    mean2 = jnp.mean(acc2, axis=-1, keepdims=True)
    cent2 = acc2 - mean2
    var2 = jnp.mean(cent2 * cent2, axis=-1, keepdims=True)
    h2 = cent2 * lax.rsqrt(var2 + eps)
    h2 = h2 * g2_ref[...].astype(jnp.float32) + beta2_ref[...].astype(jnp.float32)
    h2 = jnp.maximum(h2, 0.0)

    x_res = x_pad_ref[0, pl.ds(pad1, L), :].astype(jnp.float32)
    out_ref[0] = (h2 + x_res).astype(out_ref.dtype)


def residual_block_b(x, params, *, kernel_size, dilation, eps=1e-8):
    """x: (B, L, C) float32 -> (B, L, C). Causal dilated residual block (b)."""
    B, L, C = x.shape
    w1, b1, g1, be1, w2, b2, g2, be2 = params
    k = kernel_size
    d = dilation
    pad1 = (k - 1) * d
    pad2 = (k - 1) * 2 * d
    Lp1 = L + pad1
    Lp2 = L + pad2

    # Causal left-pad along the sequence axis for conv1 (done once in HBM).
    x_pad = jnp.pad(x, ((0, 0), (pad1, 0), (0, 0)))

    kern = functools.partial(
        _residual_block_b_kernel,
        kernel_size=k, dilation=d, seq_len=L, eps=float(eps),
    )

    const3 = lambda b: (0, 0, 0)
    const2 = lambda b: (0, 0)

    return pl.pallas_call(
        kern,
        out_shape=jax.ShapeDtypeStruct((B, L, C), x.dtype),
        grid=(B,),
        in_specs=[
            pl.BlockSpec((1, Lp1, C), lambda b: (b, 0, 0)),   # x_pad: one batch per step
            pl.BlockSpec((k, C, C), const3),                  # conv1 weights (resident)
            pl.BlockSpec((1, C), const2),                     # conv1 bias
            pl.BlockSpec((1, C), const2),                     # ln1 gamma
            pl.BlockSpec((1, C), const2),                     # ln1 beta
            pl.BlockSpec((k, C, C), const3),                  # conv2 weights (resident)
            pl.BlockSpec((1, C), const2),                     # conv2 bias
            pl.BlockSpec((1, C), const2),                     # ln2 gamma
            pl.BlockSpec((1, C), const2),                     # ln2 beta
        ],
        out_specs=pl.BlockSpec((1, L, C), lambda b: (b, 0, 0)),
        scratch_shapes=[pltpu.VMEM((Lp2, C), jnp.float32)],
        compiler_params=pltpu.CompilerParams(
            dimension_semantics=("parallel",),
            vmem_limit_bytes=48 * 1024 * 1024,   # well within v7x's 64 MiB VMEM
        ),
    )(x_pad, w1, b1, g1, be1, w2, b2, g2, be2)


def residual_block_b_ref(x, params, *, kernel_size, dilation, eps=1e-8):
    """Pure-JAX reference with identical math (for correctness check)."""
    w1, b1, g1, be1, w2, b2, g2, be2 = params
    k, d = kernel_size, dilation

    def causal_conv(h, w, b, dil):
        pad = (k - 1) * dil
        hp = jnp.pad(h, ((0, 0), (pad, 0), (0, 0)))
        L = h.shape[1]
        acc = jnp.broadcast_to(b[None], (h.shape[0], L, h.shape[2])).astype(jnp.float32)
        for j in range(k):
            acc = acc + jnp.einsum('blc,co->blo', hp[:, j * dil:j * dil + L, :], w[j],
                                   preferred_element_type=jnp.float32)
        return acc

    def layer_norm(h, g, be):
        mu = jnp.mean(h, axis=-1, keepdims=True)
        c = h - mu
        var = jnp.mean(c * c, axis=-1, keepdims=True)
        return c * lax.rsqrt(var + eps) * g[None] + be[None]

    h1 = jnp.maximum(layer_norm(causal_conv(x, w1, b1, d), g1, be1), 0.0)
    h2 = jnp.maximum(layer_norm(causal_conv(h1, w2, b2, 2 * d), g2, be2), 0.0)
    return (h2 + x).astype(x.dtype)


def init_params(key, channels, kernel_size):
    """PyTorch-style init. Conv weights stored per-tap as (k, C_in, C_out):
    tap j corresponds to conv.weight[:, :, 0, j].T in the PyTorch layout."""
    ks = jax.random.split(key, 4)
    fan_in = channels * 1 * kernel_size
    bound = 1.0 / math.sqrt(fan_in)
    w1 = jax.random.uniform(ks[0], (kernel_size, channels, channels), jnp.float32, -bound, bound)
    b1 = jax.random.uniform(ks[1], (1, channels), jnp.float32, -bound, bound)
    w2 = jax.random.uniform(ks[2], (kernel_size, channels, channels), jnp.float32, -bound, bound)
    b2 = jax.random.uniform(ks[3], (1, channels), jnp.float32, -bound, bound)
    g1 = jnp.ones((1, channels), jnp.float32)
    be1 = jnp.zeros((1, channels), jnp.float32)
    g2 = jnp.ones((1, channels), jnp.float32)
    be2 = jnp.zeros((1, channels), jnp.float32)
    return (w1, b1, g1, be1, w2, b2, g2, be2)


if __name__ == "__main__":
    key = jax.random.PRNGKey(0)
    B, L, C = 2, 16, 64          # batch, sequence length, channels
    k, d = 3, 2                  # kernel_size, dilation
    kx, kp = jax.random.split(key)

    x = jax.random.normal(kx, (B, L, C), dtype=jnp.float32)
    params = init_params(kp, C, k)

    y = residual_block_b(x, params, kernel_size=k, dilation=d)
    jax.block_until_ready(y)
    assert y.shape == (B, L, C) and y.dtype == jnp.float32

    y_ref = residual_block_b_ref(x, params, kernel_size=k, dilation=d)
    np.testing.assert_allclose(np.asarray(y), np.asarray(y_ref), rtol=1e-2, atol=1e-2)

    print("KERNEL_OK")
</pallas_src>

<mosaic_0001>
module attributes {stable_mosaic.version = 11 : i64} {
  func.func @_residual_block_b_kernel(%arg0: i32, %arg1: memref<1x20x64xf32, #tpu.memory_space<vmem>>, %arg2: memref<3x64x64xf32, #tpu.memory_space<vmem>>, %arg3: memref<1x64xf32, #tpu.memory_space<vmem>>, %arg4: memref<1x64xf32, #tpu.memory_space<vmem>>, %arg5: memref<1x64xf32, #tpu.memory_space<vmem>>, %arg6: memref<3x64x64xf32, #tpu.memory_space<vmem>>, %arg7: memref<1x64xf32, #tpu.memory_space<vmem>>, %arg8: memref<1x64xf32, #tpu.memory_space<vmem>>, %arg9: memref<1x64xf32, #tpu.memory_space<vmem>>, %arg10: memref<1x16x64xf32, #tpu.memory_space<vmem>>, %arg11: memref<24x64xf32, #tpu.memory_space<vmem>>) attributes {dimension_semantics = [#tpu.dimension_semantics<parallel>], iteration_bounds = array<i64: 2>, scalar_prefetch = 0 : i64, scratch_operands = 1 : i64, tpu.core_type = #tpu.core_type<tc>, window_params = [{transform_indices = @transform_0, window_bounds = array<i64: 1, 20, 64>}, {pipeline_mode = #tpu.pipeline_mode<synchronous>, transform_indices = @transform_1, window_bounds = array<i64: 3, 64, 64>}, {pipeline_mode = #tpu.pipeline_mode<synchronous>, transform_indices = @transform_2, window_bounds = array<i64: 1, 64>}, {pipeline_mode = #tpu.pipeline_mode<synchronous>, transform_indices = @transform_3, window_bounds = array<i64: 1, 64>}, {pipeline_mode = #tpu.pipeline_mode<synchronous>, transform_indices = @transform_4, window_bounds = array<i64: 1, 64>}, {pipeline_mode = #tpu.pipeline_mode<synchronous>, transform_indices = @transform_5, window_bounds = array<i64: 3, 64, 64>}, {pipeline_mode = #tpu.pipeline_mode<synchronous>, transform_indices = @transform_6, window_bounds = array<i64: 1, 64>}, {pipeline_mode = #tpu.pipeline_mode<synchronous>, transform_indices = @transform_7, window_bounds = array<i64: 1, 64>}, {pipeline_mode = #tpu.pipeline_mode<synchronous>, transform_indices = @transform_8, window_bounds = array<i64: 1, 64>}, {transform_indices = @transform_9, window_bounds = array<i64: 1, 16, 64>}]} {
    %cst = arith.constant 0.000000e+00 : f32
    %0 = vector.broadcast %cst : f32 to vector<16x64xf32>
    %c0 = arith.constant 0 : index
    %c0_0 = arith.constant 0 : index
    %1 = vector.load %arg3[%c0, %c0_0] : memref<1x64xf32, #tpu.memory_space<vmem>>, vector<1x64xf32>
    %2 = vector.broadcast %1 : vector<1x64xf32> to vector<16x64xf32>
    %3 = arith.addf %0, %2 : vector<16x64xf32>
    %c0_1 = arith.constant 0 : index
    %c0_2 = arith.constant 0 : index
    %c0_3 = arith.constant 0 : index
    %4 = vector.load %arg1[%c0_1, %c0_2, %c0_3] : memref<1x20x64xf32, #tpu.memory_space<vmem>>, vector<1x16x64xf32>
    %5 = vector.shape_cast %4 : vector<1x16x64xf32> to vector<16x64xf32>
    %c0_4 = arith.constant 0 : index
    %c0_5 = arith.constant 0 : index
    %c0_6 = arith.constant 0 : index
    %6 = vector.load %arg2[%c0_4, %c0_5, %c0_6] : memref<3x64x64xf32, #tpu.memory_space<vmem>>, vector<1x64x64xf32>
    %7 = vector.shape_cast %6 : vector<1x64x64xf32> to vector<64x64xf32>
    %cst_7 = arith.constant dense<0.000000e+00> : vector<16x64xf32>
    %8 = tpu.matmul %5, %7, %cst_7 {dimension_numbers = #tpu.dot_dimension_numbers<[1], [0], [0], [1], [0, 0, 1, 1], [], []>} : vector<16x64xf32>, vector<64x64xf32>, vector<16x64xf32> -> vector<16x64xf32>
    %9 = arith.addf %3, %8 : vector<16x64xf32>
    %c0_8 = arith.constant 0 : index
    %c2 = arith.constant 2 : index
    %c0_9 = arith.constant 0 : index
    %10 = vector.load %arg1[%c0_8, %c2, %c0_9] : memref<1x20x64xf32, #tpu.memory_space<vmem>>, vector<1x16x64xf32>
    %11 = vector.shape_cast %10 : vector<1x16x64xf32> to vector<16x64xf32>
    %c1 = arith.constant 1 : index
    %c0_10 = arith.constant 0 : index
    %c0_11 = arith.constant 0 : index
    %12 = vector.load %arg2[%c1, %c0_10, %c0_11] : memref<3x64x64xf32, #tpu.memory_space<vmem>>, vector<1x64x64xf32>
    %13 = vector.shape_cast %12 : vector<1x64x64xf32> to vector<64x64xf32>
    %cst_12 = arith.constant dense<0.000000e+00> : vector<16x64xf32>
    %14 = tpu.matmul %11, %13, %cst_12 {dimension_numbers = #tpu.dot_dimension_numbers<[1], [0], [0], [1], [0, 0, 1, 1], [], []>} : vector<16x64xf32>, vector<64x64xf32>, vector<16x64xf32> -> vector<16x64xf32>
    %15 = arith.addf %9, %14 : vector<16x64xf32>
    %c0_13 = arith.constant 0 : index
    %c4 = arith.constant 4 : index
    %c0_14 = arith.constant 0 : index
    %16 = vector.load %arg1[%c0_13, %c4, %c0_14] : memref<1x20x64xf32, #tpu.memory_space<vmem>>, vector<1x16x64xf32>
    %17 = vector.shape_cast %16 : vector<1x16x64xf32> to vector<16x64xf32>
    %c2_15 = arith.constant 2 : index
    %c0_16 = arith.constant 0 : index
    %c0_17 = arith.constant 0 : index
    %18 = vector.load %arg2[%c2_15, %c0_16, %c0_17] : memref<3x64x64xf32, #tpu.memory_space<vmem>>, vector<1x64x64xf32>
    %19 = vector.shape_cast %18 : vector<1x64x64xf32> to vector<64x64xf32>
    %cst_18 = arith.constant dense<0.000000e+00> : vector<16x64xf32>
    %20 = tpu.matmul %17, %19, %cst_18 {dimension_numbers = #tpu.dot_dimension_numbers<[1], [0], [0], [1], [0, 0, 1, 1], [], []>} : vector<16x64xf32>, vector<64x64xf32>, vector<16x64xf32> -> vector<16x64xf32>
    %21 = arith.addf %15, %20 : vector<16x64xf32>
    %cst_19 = arith.constant dense<0.000000e+00> : vector<16xf32>
    %22 = vector.multi_reduction <add>, %21, %cst_19 [1] : vector<16x64xf32> to vector<16xf32>
    %23 = vector.shape_cast %22 : vector<16xf32> to vector<16x1xf32>
    %cst_20 = arith.constant 6.400000e+01 : f32
    %24 = vector.broadcast %cst_20 : f32 to vector<16x1xf32>
    %25 = arith.divf %23, %24 : vector<16x1xf32>
    %26 = vector.broadcast %25 : vector<16x1xf32> to vector<16x64xf32>
    %27 = arith.subf %21, %26 : vector<16x64xf32>
    %28 = arith.mulf %27, %27 : vector<16x64xf32>
    %cst_21 = arith.constant dense<0.000000e+00> : vector<16xf32>
    %29 = vector.multi_reduction <add>, %28, %cst_21 [1] : vector<16x64xf32> to vector<16xf32>
    %30 = vector.shape_cast %29 : vector<16xf32> to vector<16x1xf32>
    %cst_22 = arith.constant 6.400000e+01 : f32
    %31 = vector.broadcast %cst_22 : f32 to vector<16x1xf32>
    %32 = arith.divf %30, %31 : vector<16x1xf32>
    %cst_23 = arith.constant 9.99999993E-9 : f32
    %33 = vector.broadcast %cst_23 : f32 to vector<16x1xf32>
    %34 = arith.addf %32, %33 : vector<16x1xf32>
    %35 = math.rsqrt %34 : vector<16x1xf32>
    %36 = vector.broadcast %35 : vector<16x1xf32> to vector<16x64xf32>
    %37 = arith.mulf %27, %36 : vector<16x64xf32>
    %c0_24 = arith.constant 0 : index
    %c0_25 = arith.constant 0 : index
    %38 = vector.load %arg4[%c0_24, %c0_25] : memref<1x64xf32, #tpu.memory_space<vmem>>, vector<1x64xf32>
    %39 = vector.broadcast %38 : vector<1x64xf32> to vector<16x64xf32>
    %40 = arith.mulf %37, %39 : vector<16x64xf32>
    %c0_26 = arith.constant 0 : index
    %c0_27 = arith.constant 0 : index
    %41 = vector.load %arg5[%c0_26, %c0_27] : memref<1x64xf32, #tpu.memory_space<vmem>>, vector<1x64xf32>
    %42 = vector.broadcast %41 : vector<1x64xf32> to vector<16x64xf32>
    %43 = arith.addf %40, %42 : vector<16x64xf32>
    %cst_28 = arith.constant 0.000000e+00 : f32
    %44 = vector.broadcast %cst_28 : f32 to vector<16x64xf32>
    %45 = arith.maximumf %43, %44 : vector<16x64xf32>
    %cst_29 = arith.constant 0.000000e+00 : f32
    %46 = vector.broadcast %cst_29 : f32 to vector<8x64xf32>
    %c0_30 = arith.constant 0 : index
    %c0_31 = arith.constant 0 : index
    %47 = vector.load %arg11[%c0_30, %c0_31] : memref<24x64xf32, #tpu.memory_space<vmem>>, vector<8x64xf32>
    tpu.vector_store %arg11[%c0_30, %c0_31], %46 {strides = array<i32>} : memref<24x64xf32, #tpu.memory_space<vmem>>, vector<8x64xf32>,
    %c8 = arith.constant 8 : index
    %c0_32 = arith.constant 0 : index
    %48 = vector.load %arg11[%c8, %c0_32] : memref<24x64xf32, #tpu.memory_space<vmem>>, vector<16x64xf32>
    tpu.vector_store %arg11[%c8, %c0_32], %45 {strides = array<i32>} : memref<24x64xf32, #tpu.memory_space<vmem>>, vector<16x64xf32>,
    %cst_33 = arith.constant 0.000000e+00 : f32
    %49 = vector.broadcast %cst_33 : f32 to vector<16x64xf32>
    %c0_34 = arith.constant 0 : index
    %c0_35 = arith.constant 0 : index
    %50 = vector.load %arg7[%c0_34, %c0_35] : memref<1x64xf32, #tpu.memory_space<vmem>>, vector<1x64xf32>
    %51 = vector.broadcast %50 : vector<1x64xf32> to vector<16x64xf32>
    %52 = arith.addf %49, %51 : vector<16x64xf32>
    %c0_36 = arith.constant 0 : index
    %c0_37 = arith.constant 0 : index
    %53 = vector.load %arg11[%c0_36, %c0_37] : memref<24x64xf32, #tpu.memory_space<vmem>>, vector<16x64xf32>
    %c0_38 = arith.constant 0 : index
    %c0_39 = arith.constant 0 : index
    %c0_40 = arith.constant 0 : index
    %54 = vector.load %arg6[%c0_38, %c0_39, %c0_40] : memref<3x64x64xf32, #tpu.memory_space<vmem>>, vector<1x64x64xf32>
    %55 = vector.shape_cast %54 : vector<1x64x64xf32> to vector<64x64xf32>
    %cst_41 = arith.constant dense<0.000000e+00> : vector<16x64xf32>
    %56 = tpu.matmul %53, %55, %cst_41 {dimension_numbers = #tpu.dot_dimension_numbers<[1], [0], [0], [1], [0, 0, 1, 1], [], []>} : vector<16x64xf32>, vector<64x64xf32>, vector<16x64xf32> -> vector<16x64xf32>
    %57 = arith.addf %52, %56 : vector<16x64xf32>
    %c4_42 = arith.constant 4 : index
    %c0_43 = arith.constant 0 : index
    %58 = vector.load %arg11[%c4_42, %c0_43] : memref<24x64xf32, #tpu.memory_space<vmem>>, vector<16x64xf32>
    %c1_44 = arith.constant 1 : index
    %c0_45 = arith.constant 0 : index
    %c0_46 = arith.constant 0 : index
    %59 = vector.load %arg6[%c1_44, %c0_45, %c0_46] : memref<3x64x64xf32, #tpu.memory_space<vmem>>, vector<1x64x64xf32>
    %60 = vector.shape_cast %59 : vector<1x64x64xf32> to vector<64x64xf32>
    %cst_47 = arith.constant dense<0.000000e+00> : vector<16x64xf32>
    %61 = tpu.matmul %58, %60, %cst_47 {dimension_numbers = #tpu.dot_dimension_numbers<[1], [0], [0], [1], [0, 0, 1, 1], [], []>} : vector<16x64xf32>, vector<64x64xf32>, vector<16x64xf32> -> vector<16x64xf32>
    %62 = arith.addf %57, %61 : vector<16x64xf32>
    %c8_48 = arith.constant 8 : index
    %c0_49 = arith.constant 0 : index
    %63 = vector.load %arg11[%c8_48, %c0_49] : memref<24x64xf32, #tpu.memory_space<vmem>>, vector<16x64xf32>
    %c2_50 = arith.constant 2 : index
    %c0_51 = arith.constant 0 : index
    %c0_52 = arith.constant 0 : index
    %64 = vector.load %arg6[%c2_50, %c0_51, %c0_52] : memref<3x64x64xf32, #tpu.memory_space<vmem>>, vector<1x64x64xf32>
    %65 = vector.shape_cast %64 : vector<1x64x64xf32> to vector<64x64xf32>
    %cst_53 = arith.constant dense<0.000000e+00> : vector<16x64xf32>
    %66 = tpu.matmul %63, %65, %cst_53 {dimension_numbers = #tpu.dot_dimension_numbers<[1], [0], [0], [1], [0, 0, 1, 1], [], []>} : vector<16x64xf32>, vector<64x64xf32>, vector<16x64xf32> -> vector<16x64xf32>
    %67 = arith.addf %62, %66 : vector<16x64xf32>
    %cst_54 = arith.constant dense<0.000000e+00> : vector<16xf32>
    %68 = vector.multi_reduction <add>, %67, %cst_54 [1] : vector<16x64xf32> to vector<16xf32>
    %69 = vector.shape_cast %68 : vector<16xf32> to vector<16x1xf32>
    %cst_55 = arith.constant 6.400000e+01 : f32
    %70 = vector.broadcast %cst_55 : f32 to vector<16x1xf32>
    %71 = arith.divf %69, %70 : vector<16x1xf32>
    %72 = vector.broadcast %71 : vector<16x1xf32> to vector<16x64xf32>
    %73 = arith.subf %67, %72 : vector<16x64xf32>
    %74 = arith.mulf %73, %73 : vector<16x64xf32>
    %cst_56 = arith.constant dense<0.000000e+00> : vector<16xf32>
    %75 = vector.multi_reduction <add>, %74, %cst_56 [1] : vector<16x64xf32> to vector<16xf32>
    %76 = vector.shape_cast %75 : vector<16xf32> to vector<16x1xf32>
    %cst_57 = arith.constant 6.400000e+01 : f32
    %77 = vector.broadcast %cst_57 : f32 to vector<16x1xf32>
    %78 = arith.divf %76, %77 : vector<16x1xf32>
    %cst_58 = arith.constant 9.99999993E-9 : f32
    %79 = vector.broadcast %cst_58 : f32 to vector<16x1xf32>
    %80 = arith.addf %78, %79 : vector<16x1xf32>
    %81 = math.rsqrt %80 : vector<16x1xf32>
    %82 = vector.broadcast %81 : vector<16x1xf32> to vector<16x64xf32>
    %83 = arith.mulf %73, %82 : vector<16x64xf32>
    %c0_59 = arith.constant 0 : index
    %c0_60 = arith.constant 0 : index
    %84 = vector.load %arg8[%c0_59, %c0_60] : memref<1x64xf32, #tpu.memory_space<vmem>>, vector<1x64xf32>
    %85 = vector.broadcast %84 : vector<1x64xf32> to vector<16x64xf32>
    %86 = arith.mulf %83, %85 : vector<16x64xf32>
    %c0_61 = arith.constant 0 : index
    %c0_62 = arith.constant 0 : index
    %87 = vector.load %arg9[%c0_61, %c0_62] : memref<1x64xf32, #tpu.memory_space<vmem>>, vector<1x64xf32>
    %88 = vector.broadcast %87 : vector<1x64xf32> to vector<16x64xf32>
    %89 = arith.addf %86, %88 : vector<16x64xf32>
    %cst_63 = arith.constant 0.000000e+00 : f32
    %90 = vector.broadcast %cst_63 : f32 to vector<16x64xf32>
    %91 = arith.maximumf %89, %90 : vector<16x64xf32>
    %c0_64 = arith.constant 0 : index
    %c4_65 = arith.constant 4 : index
    %c0_66 = arith.constant 0 : index
    %92 = vector.load %arg1[%c0_64, %c4_65, %c0_66] : memref<1x20x64xf32, #tpu.memory_space<vmem>>, vector<1x16x64xf32>
    %93 = vector.shape_cast %92 : vector<1x16x64xf32> to vector<16x64xf32>
    %94 = arith.addf %91, %93 : vector<16x64xf32>
    %c0_67 = arith.constant 0 : index
    %c0_68 = arith.constant 0 : index
    %c0_69 = arith.constant 0 : index
    %95 = vector.load %arg10[%c0_67, %c0_68, %c0_69] : memref<1x16x64xf32, #tpu.memory_space<vmem>>, vector<1x16x64xf32>
    %96 = vector.shape_cast %95 : vector<1x16x64xf32> to vector<16x64xf32>
    %97 = vector.shape_cast %94 : vector<16x64xf32> to vector<1x16x64xf32>
    tpu.vector_store %arg10[%c0_67, %c0_68, %c0_69], %97 {strides = array<i32>} : memref<1x16x64xf32, #tpu.memory_space<vmem>>, vector<1x16x64xf32>,
    return
  }
  func.func @transform_0(%arg0: i32) -> (i32, i32, i32) {
    %c0_i32 = arith.constant 0 : i32
    %c0_i32_0 = arith.constant 0 : i32
    %c0_i32_1 = arith.constant 0 : i32
    return %arg0, %c0_i32, %c0_i32_0 : i32, i32, i32
  }
  func.func @transform_1(%arg0: i32) -> (i32, i32, i32) {
    %c0_i32 = arith.constant 0 : i32
    %c0_i32_0 = arith.constant 0 : i32
    %c0_i32_1 = arith.constant 0 : i32
    %c0_i32_2 = arith.constant 0 : i32
    return %c0_i32, %c0_i32_0, %c0_i32_1 : i32, i32, i32
  }
  func.func @transform_2(%arg0: i32) -> (i32, i32) {
    %c0_i32 = arith.constant 0 : i32
    %c0_i32_0 = arith.constant 0 : i32
    %c0_i32_1 = arith.constant 0 : i32
    return %c0_i32, %c0_i32_0 : i32, i32
  }
  func.func @transform_3(%arg0: i32) -> (i32, i32) {
    %c0_i32 = arith.constant 0 : i32
    %c0_i32_0 = arith.constant 0 : i32
    %c0_i32_1 = arith.constant 0 : i32
    return %c0_i32, %c0_i32_0 : i32, i32
  }
  func.func @transform_4(%arg0: i32) -> (i32, i32) {
    %c0_i32 = arith.constant 0 : i32
    %c0_i32_0 = arith.constant 0 : i32
    %c0_i32_1 = arith.constant 0 : i32
    return %c0_i32, %c0_i32_0 : i32, i32
  }
  func.func @transform_5(%arg0: i32) -> (i32, i32, i32) {
    %c0_i32 = arith.constant 0 : i32
    %c0_i32_0 = arith.constant 0 : i32
    %c0_i32_1 = arith.constant 0 : i32
    %c0_i32_2 = arith.constant 0 : i32
    return %c0_i32, %c0_i32_0, %c0_i32_1 : i32, i32, i32
  }
  func.func @transform_6(%arg0: i32) -> (i32, i32) {
    %c0_i32 = arith.constant 0 : i32
    %c0_i32_0 = arith.constant 0 : i32
    %c0_i32_1 = arith.constant 0 : i32
    return %c0_i32, %c0_i32_0 : i32, i32
  }
  func.func @transform_7(%arg0: i32) -> (i32, i32) {
    %c0_i32 = arith.constant 0 : i32
    %c0_i32_0 = arith.constant 0 : i32
    %c0_i32_1 = arith.constant 0 : i32
    return %c0_i32, %c0_i32_0 : i32, i32
  }
  func.func @transform_8(%arg0: i32) -> (i32, i32) {
    %c0_i32 = arith.constant 0 : i32
    %c0_i32_0 = arith.constant 0 : i32
    %c0_i32_1 = arith.constant 0 : i32
    return %c0_i32, %c0_i32_0 : i32, i32
  }
  func.func @transform_9(%arg0: i32) -> (i32, i32, i32) {
    %c0_i32 = arith.constant 0 : i32
    %c0_i32_0 = arith.constant 0 : i32
    %c0_i32_1 = arith.constant 0 : i32
    return %arg0, %c0_i32, %c0_i32_0 : i32, i32, i32
  }
}

</mosaic_0001>

<llo_original>
// kernel: tpu_custom_call.1
$region0: #{tpu_custom_call.1}
  #allocation0 [shape = 'u32[]', space=smem, size = 0x4, offset = 0x4, fixed_abs, tag = 'smem constant byte address 0x4 - core index']
  #allocation1 [shape = 'u32[144,128]{1,0:T(1,128)}', space=vmem, size = 0x12000, scoped, tag = 'internal scratch']
  #allocation2 [shape = 'f32[24,64]{1,0:T(8,128)}', space=vmem, size = 0x3000, scoped, tag = 'scratch operand']
  %s0 = inlined_call_operand.vmem [shape: f32[2,20,64], index: 0, kind: input, shape index: {}]
  %s1 = inlined_call_operand.hbm [shape: f32[3,64,64], index: 1, kind: input, shape index: {}]
  %s2 = inlined_call_operand.vmem [shape: f32[1,64], index: 2, kind: input, shape index: {}]
  %s3 = inlined_call_operand.vmem [shape: f32[1,64], index: 3, kind: input, shape index: {}]
  %s4 = inlined_call_operand.vmem [shape: f32[1,64], index: 4, kind: input, shape index: {}]
  %s5 = inlined_call_operand.hbm [shape: f32[3,64,64], index: 5, kind: input, shape index: {}]
  %s6 = inlined_call_operand.vmem [shape: f32[1,64], index: 6, kind: input, shape index: {}]
  %s7 = inlined_call_operand.vmem [shape: f32[1,64], index: 7, kind: input, shape index: {}]
  %s8 = inlined_call_operand.vmem [shape: f32[1,64], index: 8, kind: input, shape index: {}]
  %s9 = inlined_call_operand.hbm [shape: f32[2,16,64], index: 9, kind: output, shape index: {}]
  %s10 = sld [smem:[#allocation0]]
  $region77: #{tpu_custom_call.1} parent=0
    _
  %s12 = ssub.s32 1, %s10
  %s13 = scalar_select 0, %s12, %s10
  $region1: #{tpu_custom_call.1} parent=0
    #allocation3 [shape = 'u8[98304]{0}', space=vmem, size = 0x18000, scoped, tag = 'input window, operand 1, single buffered']
    #allocation4 [shape = 's32[2]{0}', space=sflag, size = 0x8, scoped, tag = 'scoped memory for tpu_custom_call.1']
    #allocation5 [shape = 's32[2]{0}', space=sflag, size = 0x8, scoped, tag = 'scoped memory for tpu_custom_call.1']
    #allocation6 [shape = 'u8[98304]{0}', space=vmem, size = 0x18000, scoped, tag = 'input window, operand 5, single buffered']
    #allocation7 [shape = 's32[1]{0}', space=sflag, size = 0x4, scoped, tag = 'scoped memory for tpu_custom_call.1']
    #allocation8 [shape = 'u8[16384]{0}', space=vmem, size = 0x4000, scoped, tag = 'output window, operand 0']
    %14 = vsyncpa [#allocation4], 0
    %15 = vsyncpa [#allocation7], 0
    %16 = vsyncpa [#allocation5], 0
    %s17 = scalar_lea.sflag [#allocation5], 1
    %18 = vsyncpa %s17, 0
    loop: start=0, step=1, limit=4
    $region2: #{tpu_custom_call.1} parent=1 // loop_pre_header
      _
    $region3: #{tpu_custom_call.1} parent=1 // loop_header
      %s20 = sphi 0, %s24
      %p21 = scmp.ge.s32.totalorder %s20, 4
      %s30 = sphi 0, %s32
      %s33 = sphi 0, %s30
      %s34 = sphi 0, %s33
      %s50 = sphi 0, %s34
      %s54 = sphi 0, %s54
      %s56 = sphi 0, %s54
      %s57 = sphi 0, %s56
      %s71 = sphi 0, %s57
      %s75 = sphi 0, %s75
      %s77 = sphi 0, %s75
      %s78 = sphi 0, %s77
      %s92 = sphi 0, %s78
      %s96 = sphi 0, %s96
      %s98 = sphi 0, %s96
      %s99 = sphi 0, %s98
      %s113 = sphi 0, %s99
      %s117 = sphi 0, %s117
      %s119 = sphi 0, %s117
      %s120 = sphi 0, %s119
      %s134 = sphi 0, %s120
      %s138 = sphi 0, %s138
      %s140 = sphi 0, %s138
      %s141 = sphi 0, %s140
      %s155 = sphi 0, %s141
      %s159 = sphi 0, %s159
      %s161 = sphi 0, %s159
      %s162 = sphi 0, %s161
      %s176 = sphi 0, %s162
      %s180 = sphi 0, %s180
      %s182 = sphi 0, %s180
      %s183 = sphi 0, %s182
      %s197 = sphi 0, %s183
      %s201 = sphi 0, %s201
      %s203 = sphi 0, %s201
      %s204 = sphi 0, %s203
      %s218 = sphi 0, %s204
      %s224 = sphi 0, %s226
      %s227 = sphi 0, %s224
      %s228 = sphi 0, %s227
      %s244 = sphi 0, %s228
    $region4: #{tpu_custom_call.1} parent=1 // loop_header_branch
      %23 = sbr.rel (%p21) target = $region8
    $region5: #{tpu_custom_call.1} parent=1 // loop_body
      %s25 = ssub.s32 %s20, 1
      %s26 = ssub.s32 %s20, 2
      %s27 = sadd.s32 %s20, 1
      %s28 = ssub.s32 %s20, %s27
      %p29 = scmp.eq.s32.totalorder %s28, 0
      %s31 = sadd.s32 %s30, 1
      %s32 = scalar_select %p29, %s30, %s31
      %p35 = pneg %p29
      %p36 = scmp.eq.s32.totalorder %s20, 1
      %p37 = por %p35, %p36
      %p38 = scmp.ne.s32.totalorder %s30, %s33
      %p39 = scmp.eq.s32.totalorder %s20, 0
      %p40 = por %p38, %p39
      %p41 = scmp.ne.s32.totalorder %s30, %s33
      %p42 = scmp.eq.s32.totalorder %s25, 1
      %p43 = por %p41, %p42
      %p44 = scmp.ne.s32.totalorder %s33, %s34
      %p45 = scmp.eq.s32.totalorder %s25, 0
      %p46 = por %p44, %p45
      %p47 = scmp.ne.s32.totalorder %s33, %s34
      %p48 = scmp.eq.s32.totalorder %s26, 1
      %p49 = por %p47, %p48
      %p51 = scmp.ne.s32.totalorder %s34, %s50
      %p52 = scmp.eq.s32.totalorder %s26, 0
      %p53 = por %p51, %p52
      %s55 = sadd.s32 %s54, 1
      %p58 = scmp.eq.s32.totalorder %s20, 1
      %p59 = scmp.ne.s32.totalorder %s54, %s56
      %p60 = scmp.eq.s32.totalorder %s20, 0
      %p61 = por %p59, %p60
      %p62 = scmp.ne.s32.totalorder %s54, %s56
      %p63 = scmp.eq.s32.totalorder %s25, 1
      %p64 = por %p62, %p63
      %p65 = scmp.ne.s32.totalorder %s56, %s57
      %p66 = scmp.eq.s32.totalorder %s25, 0
      %p67 = por %p65, %p66
      %p68 = scmp.ne.s32.totalorder %s56, %s57
      %p69 = scmp.eq.s32.totalorder %s26, 1
      %p70 = por %p68, %p69
      %p72 = scmp.ne.s32.totalorder %s57, %s71
      %p73 = scmp.eq.s32.totalorder %s26, 0
      %p74 = por %p72, %p73
      %s76 = sadd.s32 %s75, 1
      %p79 = scmp.eq.s32.totalorder %s20, 1
      %p80 = scmp.ne.s32.totalorder %s75, %s77
      %p81 = scmp.eq.s32.totalorder %s20, 0
      %p82 = por %p80, %p81
      %p83 = scmp.ne.s32.totalorder %s75, %s77
      %p84 = scmp.eq.s32.totalorder %s25, 1
      %p85 = por %p83, %p84
      %p86 = scmp.ne.s32.totalorder %s77, %s78
      %p87 = scmp.eq.s32.totalorder %s25, 0
      %p88 = por %p86, %p87
      %p89 = scmp.ne.s32.totalorder %s77, %s78
      %p90 = scmp.eq.s32.totalorder %s26, 1
      %p91 = por %p89, %p90
      %p93 = scmp.ne.s32.totalorder %s78, %s92
      %p94 = scmp.eq.s32.totalorder %s26, 0
      %p95 = por %p93, %p94
      %s97 = sadd.s32 %s96, 1
      %p100 = scmp.eq.s32.totalorder %s20, 1
      %p101 = scmp.ne.s32.totalorder %s96, %s98
      %p102 = scmp.eq.s32.totalorder %s20, 0
      %p103 = por %p101, %p102
      %p104 = scmp.ne.s32.totalorder %s96, %s98
      %p105 = scmp.eq.s32.totalorder %s25, 1
      %p106 = por %p104, %p105
      %p107 = scmp.ne.s32.totalorder %s98, %s99
      %p108 = scmp.eq.s32.totalorder %s25, 0
      %p109 = por %p107, %p108
      %p110 = scmp.ne.s32.totalorder %s98, %s99
      %p111 = scmp.eq.s32.totalorder %s26, 1
      %p112 = por %p110, %p111
      %p114 = scmp.ne.s32.totalorder %s99, %s113
      %p115 = scmp.eq.s32.totalorder %s26, 0
      %p116 = por %p114, %p115
      %s118 = sadd.s32 %s117, 1
      %p121 = scmp.eq.s32.totalorder %s20, 1
      %p122 = scmp.ne.s32.totalorder %s117, %s119
      %p123 = scmp.eq.s32.totalorder %s20, 0
      %p124 = por %p122, %p123
      %p125 = scmp.ne.s32.totalorder %s117, %s119
      %p126 = scmp.eq.s32.totalorder %s25, 1
      %p127 = por %p125, %p126
      %p128 = scmp.ne.s32.totalorder %s119, %s120
      %p129 = scmp.eq.s32.totalorder %s25, 0
      %p130 = por %p128, %p129
      %p131 = scmp.ne.s32.totalorder %s119, %s120
      %p132 = scmp.eq.s32.totalorder %s26, 1
      %p133 = por %p131, %p132
      %p135 = scmp.ne.s32.totalorder %s120, %s134
      %p136 = scmp.eq.s32.totalorder %s26, 0
      %p137 = por %p135, %p136
      %s139 = sadd.s32 %s138, 1
      %p142 = scmp.eq.s32.totalorder %s20, 1
      %p143 = scmp.ne.s32.totalorder %s138, %s140
      %p144 = scmp.eq.s32.totalorder %s20, 0
      %p145 = por %p143, %p144
      %p146 = scmp.ne.s32.totalorder %s138, %s140
      %p147 = scmp.eq.s32.totalorder %s25, 1
      %p148 = por %p146, %p147
      %p149 = scmp.ne.s32.totalorder %s140, %s141
      %p150 = scmp.eq.s32.totalorder %s25, 0
      %p151 = por %p149, %p150
      %p152 = scmp.ne.s32.totalorder %s140, %s141
      %p153 = scmp.eq.s32.totalorder %s26, 1
      %p154 = por %p152, %p153
      %p156 = scmp.ne.s32.totalorder %s141, %s155
      %p157 = scmp.eq.s32.totalorder %s26, 0
      %p158 = por %p156, %p157
      %s160 = sadd.s32 %s159, 1
      %p163 = scmp.eq.s32.totalorder %s20, 1
      %p164 = scmp.ne.s32.totalorder %s159, %s161
      %p165 = scmp.eq.s32.totalorder %s20, 0
      %p166 = por %p164, %p165
      %p167 = scmp.ne.s32.totalorder %s159, %s161
      %p168 = scmp.eq.s32.totalorder %s25, 1
      %p169 = por %p167, %p168
      %p170 = scmp.ne.s32.totalorder %s161, %s162
      %p171 = scmp.eq.s32.totalorder %s25, 0
      %p172 = por %p170, %p171
      %p173 = scmp.ne.s32.totalorder %s161, %s162
      %p174 = scmp.eq.s32.totalorder %s26, 1
      %p175 = por %p173, %p174
      %p177 = scmp.ne.s32.totalorder %s162, %s176
      %p178 = scmp.eq.s32.totalorder %s26, 0
      %p179 = por %p177, %p178
      %s181 = sadd.s32 %s180, 1
      %p184 = scmp.eq.s32.totalorder %s20, 1
      %p185 = scmp.ne.s32.totalorder %s180, %s182
      %p186 = scmp.eq.s32.totalorder %s20, 0
      %p187 = por %p185, %p186
      %p188 = scmp.ne.s32.totalorder %s180, %s182
      %p189 = scmp.eq.s32.totalorder %s25, 1
      %p190 = por %p188, %p189
      %p191 = scmp.ne.s32.totalorder %s182, %s183
      %p192 = scmp.eq.s32.totalorder %s25, 0
      %p193 = por %p191, %p192
      %p194 = scmp.ne.s32.totalorder %s182, %s183
      %p195 = scmp.eq.s32.totalorder %s26, 1
      %p196 = por %p194, %p195
      %p198 = scmp.ne.s32.totalorder %s183, %s197
      %p199 = scmp.eq.s32.totalorder %s26, 0
      %p200 = por %p198, %p199
      %s202 = sadd.s32 %s201, 1
      %p205 = scmp.eq.s32.totalorder %s20, 1
      %p206 = scmp.ne.s32.totalorder %s201, %s203
      %p207 = scmp.eq.s32.totalorder %s20, 0
      %p208 = por %p206, %p207
      %p209 = scmp.ne.s32.totalorder %s201, %s203
      %p210 = scmp.eq.s32.totalorder %s25, 1
      %p211 = por %p209, %p210
      %p212 = scmp.ne.s32.totalorder %s203, %s204
      %p213 = scmp.eq.s32.totalorder %s25, 0
      %p214 = por %p212, %p213
      %p215 = scmp.ne.s32.totalorder %s203, %s204
      %p216 = scmp.eq.s32.totalorder %s26, 1
      %p217 = por %p215, %p216
      %p219 = scmp.ne.s32.totalorder %s204, %s218
      %p220 = scmp.eq.s32.totalorder %s26, 0
      %p221 = por %p219, %p220
      %s222 = ssub.s32 %s20, %s27
      %p223 = scmp.eq.s32.totalorder %s222, 0
      %s225 = sadd.s32 %s224, 1
      %s226 = scalar_select %p223, %s224, %s225
      %p229 = pneg %p223
      %p230 = scmp.eq.s32.totalorder %s20, 1
      %p231 = por %p229, %p230
      %p232 = scmp.ne.s32.totalorder %s224, %s227
      %p233 = scmp.eq.s32.totalorder %s20, 0
      %p234 = por %p232, %p233
      %p235 = scmp.ne.s32.totalorder %s224, %s227
      %p236 = scmp.eq.s32.totalorder %s25, 1
      %p237 = por %p235, %p236
      %p238 = scmp.ne.s32.totalorder %s227, %s228
      %p239 = scmp.eq.s32.totalorder %s25, 0
      %p240 = por %p238, %p239
      %p241 = scmp.ne.s32.totalorder %s227, %s228
      %p242 = scmp.eq.s32.totalorder %s26, 1
      %p243 = por %p241, %p242
      %p245 = scmp.ne.s32.totalorder %s228, %s244
      %p246 = scmp.eq.s32.totalorder %s26, 0
      %p247 = por %p245, %p246
      %p248 = scmp.le.s32.totalorder 1, %s20
      %p249 = scmp.lt.s32.totalorder %s20, 3
      %p250 = pnand %p248, %p249
      %p251 = pneg %p250
      // Predicated region
      $region9: #{tpu_custom_call.1} parent=5 // pred_check
        _
      $region10: #{tpu_custom_call.1} parent=5 // pred_check_branch
        %253 = sbr.rel (%p250) target = $region12
      $region11: #{tpu_custom_call.1} parent=5 // pred_region
        %s254 = ssub.s32 %s20, 1
        // Predicated region
        $region13: #{tpu_custom_call.1} parent=11 // pred_check
          %p255 = pneg %p67
        $region14: #{tpu_custom_call.1} parent=11 // pred_check_branch
          %257 = sbr.rel (%p255) target = $region16
        $region15: #{tpu_custom_call.1} parent=11 // pred_region
          %s259 = ssub.s32 3072, 3072
          %260 = vsyncadd [#allocation4], %s259
          %s261 = sshll.u32 [#allocation3], 4
          %s262 = int_to_ptr.vmem [resolvable:$true] %s261
          %267 = dma.hbm_to_vmem [thread:$0]  %s1, 3072, %s262, [#allocation4], 128, 128, 8
        $region16: #{tpu_custom_call.1} parent=11 // pred_fallthru
          _
        // Predicated region
        $region17: #{tpu_custom_call.1} parent=11 // pred_check
          %p268 = pneg %p88
        $region18: #{tpu_custom_call.1} parent=11 // pred_check_branch
          %270 = sbr.rel (%p268) target = $region20
        $region19: #{tpu_custom_call.1} parent=11 // pred_region
          _
        $region20: #{tpu_custom_call.1} parent=11 // pred_fallthru
          _
        // Predicated region
        $region21: #{tpu_custom_call.1} parent=11 // pred_check
          %p271 = pneg %p109
        $region22: #{tpu_custom_call.1} parent=11 // pred_check_branch
          %273 = sbr.rel (%p271) target = $region24
        $region23: #{tpu_custom_call.1} parent=11 // pred_region
          _
        $region24: #{tpu_custom_call.1} parent=11 // pred_fallthru
          _
        // Predicated region
        $region25: #{tpu_custom_call.1} parent=11 // pred_check
          %p274 = pneg %p130
        $region26: #{tpu_custom_call.1} parent=11 // pred_check_branch
          %276 = sbr.rel (%p274) target = $region28
        $region27: #{tpu_custom_call.1} parent=11 // pred_region
          _
        $region28: #{tpu_custom_call.1} parent=11 // pred_fallthru
          _
        // Predicated region
        $region29: #{tpu_custom_call.1} parent=11 // pred_check
          %p277 = pneg %p151
        $region30: #{tpu_custom_call.1} parent=11 // pred_check_branch
          %279 = sbr.rel (%p277) target = $region32
        $region31: #{tpu_custom_call.1} parent=11 // pred_region
          %s281 = ssub.s32 3072, 3072
          %282 = vsyncadd [#allocation7], %s281
          %s283 = sshll.u32 [#allocation6], 4
          %s284 = int_to_ptr.vmem [resolvable:$true] %s283
          %289 = dma.hbm_to_vmem [thread:$0]  %s5, 3072, %s284, [#allocation7], 128, 128, 8
        $region32: #{tpu_custom_call.1} parent=11 // pred_fallthru
          _
        // Predicated region
        $region33: #{tpu_custom_call.1} parent=11 // pred_check
          %p290 = pneg %p172
        $region34: #{tpu_custom_call.1} parent=11 // pred_check_branch
          %292 = sbr.rel (%p290) target = $region36
        $region35: #{tpu_custom_call.1} parent=11 // pred_region
          _
        $region36: #{tpu_custom_call.1} parent=11 // pred_fallthru
          _
        // Predicated region
        $region37: #{tpu_custom_call.1} parent=11 // pred_check
          %p293 = pneg %p193
        $region38: #{tpu_custom_call.1} parent=11 // pred_check_branch
          %295 = sbr.rel (%p293) target = $region40
        $region39: #{tpu_custom_call.1} parent=11 // pred_region
          _
        $region40: #{tpu_custom_call.1} parent=11 // pred_fallthru
          _
        // Predicated region
        $region41: #{tpu_custom_call.1} parent=11 // pred_check
          %p296 = pneg %p214
        $region42: #{tpu_custom_call.1} parent=11 // pred_check_branch
          %298 = sbr.rel (%p296) target = $region44
        $region43: #{tpu_custom_call.1} parent=11 // pred_region
          _
        $region44: #{tpu_custom_call.1} parent=11 // pred_fallthru
          _
      $region12: #{tpu_custom_call.1} parent=5 // pred_fallthru
        _
      %p299 = scmp.lt.s32.totalorder %s20, 2
      // Predicated region
      $region45: #{tpu_custom_call.1} parent=5 // pred_check
        %p300 = pneg %p299
      $region46: #{tpu_custom_call.1} parent=5 // pred_check_branch
        %302 = sbr.rel (%p300) target = $region48
      $region47: #{tpu_custom_call.1} parent=5 // pred_region
        // Predicated region
        $region49: #{tpu_custom_call.1} parent=47 // pred_check
          %p303 = pneg %p40
        $region50: #{tpu_custom_call.1} parent=47 // pred_check_branch
          %305 = sbr.rel (%p303) target = $region52
        $region51: #{tpu_custom_call.1} parent=47 // pred_region
          %p306 = scmp.lt.s32.totalorder %s20, 1
          %s307 = scalar_select %p306, %s20, 1
          %s308 = smul.addr %s307, 3
          %s309 = smul.addr %s308, 8
          %s310 = scalar_lea.vmem %s0, %s309
        $region52: #{tpu_custom_call.1} parent=47 // pred_fallthru
          _
      $region48: #{tpu_custom_call.1} parent=5 // pred_fallthru
        _
      %p311 = scmp.le.s32.totalorder 1, %s20
      %p312 = scmp.lt.s32.totalorder %s20, 3
      %p313 = pnand %p311, %p312
      %p314 = pneg %p313
      // Predicated region
      $region53: #{tpu_custom_call.1} parent=5 // pred_check
        _
      $region54: #{tpu_custom_call.1} parent=5 // pred_check_branch
        %316 = sbr.rel (%p313) target = $region56
      $region55: #{tpu_custom_call.1} parent=5 // pred_region
        %s317 = ssub.s32 %s20, 1
        // Predicated region
        $region57: #{tpu_custom_call.1} parent=55 // pred_check
          %p318 = pneg %p67
        $region58: #{tpu_custom_call.1} parent=55 // pred_check_branch
          %320 = sbr.rel (%p318) target = $region60
        $region59: #{tpu_custom_call.1} parent=55 // pred_region
          %321 = dma.done [#allocation4], 3072
        $region60: #{tpu_custom_call.1} parent=55 // pred_fallthru
          _
        // Predicated region
        $region61: #{tpu_custom_call.1} parent=55 // pred_check
          %p322 = pneg %p151
        $region62: #{tpu_custom_call.1} parent=55 // pred_check_branch
          %324 = sbr.rel (%p322) target = $region64
        $region63: #{tpu_custom_call.1} parent=55 // pred_region
          %325 = dma.done [#allocation7], 3072
        $region64: #{tpu_custom_call.1} parent=55 // pred_fallthru
          _
        %p326 = scmp.lt.s32.totalorder %s25, 1
        %s327 = scalar_select %p326, %s25, 1
        %s328 = smul.addr %s327, 3
        %s329 = smul.addr %s328, 8
        %s330 = scalar_lea.vmem %s0, %s329
        %p331 = pneg %p46
        %p332 = pneg %p43
        %p333 = pneg %p67
        %p334 = pneg %p64
        %p335 = pneg %p88
        %p336 = pneg %p85
        %p337 = pneg %p109
        %p338 = pneg %p106
        %p339 = pneg %p130
        %p340 = pneg %p127
        %p341 = pneg %p151
        %p342 = pneg %p148
        %p343 = pneg %p172
        %p344 = pneg %p169
        %p345 = pneg %p193
        %p346 = pneg %p190
        %p347 = pneg %p214
        %p348 = pneg %p211
        %p349 = pneg %p240
        %p350 = pneg %p237
        %s351 = sand.u32 %s227, 1
        %s352 = scalar_lea.sflag [#allocation5], %s351
        %s353 = sand.u32 %s227, 1
        %s354 = smul.addr %s353, 16
        %s355 = scalar_lea.vmem [#allocation8], %s354
        %p356 = scmp.lt.s32.totalorder %s25, 1
        %s357 = scalar_select %p356, %s25, 1
        %s358 = smul.addr %s357, 3
        %s359 = smul.addr %s358, 8
        %s360 = scalar_lea.vmem %s0, %s359
        %v361 = vld [vmem:[%s2] sm:$0x1]
        %v363 = vlaneseq
        %v364 = vshrl.u32 %v363, 7
        %v365 = vsub.s32 0, %v364
        %v366 = vrot.slane %v361, %v365
        %v368 = vadd.f32 %v366, 0.0
        %v369 = vld [vmem:[%s360] sm:$0xff]
        %v370 = vld [vmem:[%s360 + $0x8] sm:$0xff]
        %v371 = vld [vmem:[#allocation3] sm:$0xff]
        %v372 = vld [vmem:[#allocation3 + $0x8] sm:$0xff]
        %v373 = vld [vmem:[#allocation3 + $0x10] sm:$0xff]
        %v374 = vld [vmem:[#allocation3 + $0x18] sm:$0xff]
        %v375 = vld [vmem:[#allocation3 + $0x20] sm:$0xff]
        %v376 = vld [vmem:[#allocation3 + $0x28] sm:$0xff]
        %v377 = vld [vmem:[#allocation3 + $0x30] sm:$0xff]
        %v378 = vld [vmem:[#allocation3 + $0x38] sm:$0xff]
        %vm379 = vcmask 523264
        %v381 = vsel %vm379, %v369, 0
        %v384 = vsel %vm379, %v370, 0
        %386 = vmatprep.subr.mxu0 0.0
        %387 = vmatpush1.msra.mxu0 0.0
        %388 = vmatprep.subr.mxu0 0.0
        %389 = vmatpush1.msra.mxu0 0.0
        %390 = vmatprep.subr.mxu0 0.0
        %391 = vmatpush1.msra.mxu0 0.0
        %392 = vmatprep.subr.mxu0 0.0
        %393 = vmatpush1.msra.mxu0 0.0
        %394 = vmatprep.subr.mxu0 0.0
        %395 = vmatpush1.msra.mxu0 0.0
        %396 = vmatprep.subr.mxu0 0.0
        %397 = vmatpush1.msra.mxu0 0.0
        %398 = vmatprep.subr.mxu0 0.0
        %399 = vmatpush1.msra.mxu0 0.0
        %400 = vmatprep.subr.mxu0 0.0
        %401 = vmatpush1.msra.mxu0 0.0
        %402 = vmatprep.subr.mxu0 0.0
        %403 = vmatpush1.msra.mxu0 %v378
        %404 = vmatprep.subr.mxu0 0.0
        %405 = vmatpush1.msra.mxu0 %v377
        %406 = vmatprep.subr.mxu0 0.0
        %407 = vmatpush1.msra.mxu0 %v376
        %408 = vmatprep.subr.mxu0 0.0
        %409 = vmatpush1.msra.mxu0 %v375
        %410 = vmatprep.subr.mxu0 0.0
        %411 = vmatpush1.msra.mxu0 %v374
        %412 = vmatprep.subr.mxu0 0.0
        %413 = vmatpush1.msra.mxu0 %v373
        %414 = vmatprep.subr.mxu0 0.0
        %415 = vmatpush1.msra.mxu0 %v372
        %416 = vmatprep.subr.mxu0 0.0
        %417 = vmatpush1.msra.mxu0 %v371
        %418 = vmatprep.subr.mxu0 0.0
        %419 = vmatpush2.msra.mxu0 0.0
        %420 = vmatprep.subr.mxu0 0.0
        %421 = vmatpush2.msra.mxu0 0.0
        %422 = vmatprep.subr.mxu0 0.0
        %423 = vmatpush2.msra.mxu0 0.0
        %424 = vmatprep.subr.mxu0 0.0
        %425 = vmatpush2.msra.mxu0 0.0
        %426 = vmatprep.subr.mxu0 0.0
        %427 = vmatpush2.msra.mxu0 0.0
        %428 = vmatprep.subr.mxu0 0.0
        %429 = vmatpush2.msra.mxu0 0.0
        %430 = vmatprep.subr.mxu0 0.0
        %431 = vmatpush2.msra.mxu0 0.0
        %432 = vmatprep.subr.mxu0 0.0
        %433 = vmatpush2.msra.mxu0 0.0
        %434 = vmatprep.subr.mxu0 0.0
        %435 = vmatpush2.msra.mxu0 0.0
        %436 = vmatprep.subr.mxu0 0.0
        %437 = vmatpush2.msra.mxu0 0.0
        %438 = vmatprep.subr.mxu0 0.0
        %439 = vmatpush2.msra.mxu0 0.0
        %440 = vmatprep.subr.mxu0 0.0
        %441 = vmatpush2.msra.mxu0 0.0
        %442 = vmatprep.subr.mxu0 0.0
        %443 = vmatpush2.msra.mxu0 0.0
        %444 = vmatprep.subr.mxu0 0.0
        %445 = vmatpush2.msra.mxu0 0.0
        %446 = vmatprep.subr.mxu0 0.0
        %447 = vmatpush2.msra.mxu0 0.0
        %448 = vmatprep.subr.mxu0 0.0
        %449 = vmatpush2.msra.mxu0 0.0
        %450 = vmatprep.mubr.f32.mxu0 0.0
        %451 = vmatmul.mubr.f32.gmra.mxu0 %v381
        %v452 = vpop.f32.mrf.mxu0
        %v453 = vadd.f32 0.0, %v452
        %v454 = vpop.f32.mrf.mxu0
        %455 = vmatprep.mubr.f32.mxu0 0.0
        %456 = vmatmul.mubr.f32.gmra.mxu0 %v384
        %v457 = vpop.f32.mrf.mxu0
        %v458 = vadd.f32 0.0, %v457
        %v459 = vpop.f32.mrf.mxu0
        %460 = vdwg.mxu0
        %v461 = vadd.f32 %v368, %v453
        %v462 = vadd.f32 %v368, %v458
        %v463 = vld [vmem:[%s360 + $0x2] sm:$0xff]
        %v464 = vld [vmem:[%s360 + $0xa] sm:$0xff]
        %s465 = scalar_lea.vmem [#allocation3], 64
        %v466 = vld [vmem:[%s465] sm:$0xff]
        %v467 = vld [vmem:[%s465 + $0x8] sm:$0xff]
        %v468 = vld [vmem:[%s465 + $0x10] sm:$0xff]
        %v469 = vld [vmem:[%s465 + $0x18] sm:$0xff]
        %v470 = vld [vmem:[%s465 + $0x20] sm:$0xff]
        %v471 = vld [vmem:[%s465 + $0x28] sm:$0xff]
        %v472 = vld [vmem:[%s465 + $0x30] sm:$0xff]
        %v473 = vld [vmem:[%s465 + $0x38] sm:$0xff]
        %v475 = vsel %vm379, %v463, 0
        %v478 = vsel %vm379, %v464, 0
        %480 = vmatprep.subr.mxu0 0.0
        %481 = vmatpush1.msra.mxu0 0.0
        %482 = vmatprep.subr.mxu0 0.0
        %483 = vmatpush1.msra.mxu0 0.0
        %484 = vmatprep.subr.mxu0 0.0
        %485 = vmatpush1.msra.mxu0 0.0
        %486 = vmatprep.subr.mxu0 0.0
        %487 = vmatpush1.msra.mxu0 0.0
        %488 = vmatprep.subr.mxu0 0.0
        %489 = vmatpush1.msra.mxu0 0.0
        %490 = vmatprep.subr.mxu0 0.0
        %491 = vmatpush1.msra.mxu0 0.0
        %492 = vmatprep.subr.mxu0 0.0
        %493 = vmatpush1.msra.mxu0 0.0
        %494 = vmatprep.subr.mxu0 0.0
        %495 = vmatpush1.msra.mxu0 0.0
        %496 = vmatprep.subr.mxu0 0.0
        %497 = vmatpush1.msra.mxu0 %v473
        %498 = vmatprep.subr.mxu0 0.0
        %499 = vmatpush1.msra.mxu0 %v472
        %500 = vmatprep.subr.mxu0 0.0
        %501 = vmatpush1.msra.mxu0 %v471
        %502 = vmatprep.subr.mxu0 0.0
        %503 = vmatpush1.msra.mxu0 %v470
        %504 = vmatprep.subr.mxu0 0.0
        %505 = vmatpush1.msra.mxu0 %v469
        %506 = vmatprep.subr.mxu0 0.0
        %507 = vmatpush1.msra.mxu0 %v468
        %508 = vmatprep.subr.mxu0 0.0
        %509 = vmatpush1.msra.mxu0 %v467
        %510 = vmatprep.subr.mxu0 0.0
        %511 = vmatpush1.msra.mxu0 %v466
        %512 = vmatprep.subr.mxu0 0.0
        %513 = vmatpush2.msra.mxu0 0.0
        %514 = vmatprep.subr.mxu0 0.0
        %515 = vmatpush2.msra.mxu0 0.0
        %516 = vmatprep.subr.mxu0 0.0
        %517 = vmatpush2.msra.mxu0 0.0
        %518 = vmatprep.subr.mxu0 0.0
        %519 = vmatpush2.msra.mxu0 0.0
        %520 = vmatprep.subr.mxu0 0.0
        %521 = vmatpush2.msra.mxu0 0.0
        %522 = vmatprep.subr.mxu0 0.0
        %523 = vmatpush2.msra.mxu0 0.0
        %524 = vmatprep.subr.mxu0 0.0
        %525 = vmatpush2.msra.mxu0 0.0
        %526 = vmatprep.subr.mxu0 0.0
        %527 = vmatpush2.msra.mxu0 0.0
        %528 = vmatprep.subr.mxu0 0.0
        %529 = vmatpush2.msra.mxu0 0.0
        %530 = vmatprep.subr.mxu0 0.0
        %531 = vmatpush2.msra.mxu0 0.0
        %532 = vmatprep.subr.mxu0 0.0
        %533 = vmatpush2.msra.mxu0 0.0
        %534 = vmatprep.subr.mxu0 0.0
        %535 = vmatpush2.msra.mxu0 0.0
        %536 = vmatprep.subr.mxu0 0.0
        %537 = vmatpush2.msra.mxu0 0.0
        %538 = vmatprep.subr.mxu0 0.0
        %539 = vmatpush2.msra.mxu0 0.0
        %540 = vmatprep.subr.mxu0 0.0
        %541 = vmatpush2.msra.mxu0 0.0
        %542 = vmatprep.subr.mxu0 0.0
        %543 = vmatpush2.msra.mxu0 0.0
        %544 = vmatprep.mubr.f32.mxu0 0.0
        %545 = vmatmul.mubr.f32.gmra.mxu0 %v475
        %v546 = vpop.f32.mrf.mxu0
        %v547 = vadd.f32 0.0, %v546
        %v548 = vpop.f32.mrf.mxu0
        %549 = vmatprep.mubr.f32.mxu0 0.0
        %550 = vmatmul.mubr.f32.gmra.mxu0 %v478
        %v551 = vpop.f32.mrf.mxu0
        %v552 = vadd.f32 0.0, %v551
        %v553 = vpop.f32.mrf.mxu0
        %554 = vdwg.mxu0
        %v555 = vadd.f32 %v461, %v547
        %v556 = vadd.f32 %v462, %v552
        %v557 = vld [vmem:[%s360 + $0x4] sm:$0xff]
        %v558 = vld [vmem:[%s360 + $0xc] sm:$0xff]
        %s559 = scalar_lea.vmem [#allocation3], 128
        %v560 = vld [vmem:[%s559] sm:$0xff]
        %v561 = vld [vmem:[%s559 + $0x8] sm:$0xff]
        %v562 = vld [vmem:[%s559 + $0x10] sm:$0xff]
        %v563 = vld [vmem:[%s559 + $0x18] sm:$0xff]
        %v564 = vld [vmem:[%s559 + $0x20] sm:$0xff]
        %v565 = vld [vmem:[%s559 + $0x28] sm:$0xff]
        %v566 = vld [vmem:[%s559 + $0x30] sm:$0xff]
        %v567 = vld [vmem:[%s559 + $0x38] sm:$0xff]
        %v569 = vsel %vm379, %v557, 0
        %v572 = vsel %vm379, %v558, 0
        %574 = vmatprep.subr.mxu0 0.0
        %575 = vmatpush1.msra.mxu0 0.0
        %576 = vmatprep.subr.mxu0 0.0
        %577 = vmatpush1.msra.mxu0 0.0
        %578 = vmatprep.subr.mxu0 0.0
        %579 = vmatpush1.msra.mxu0 0.0
        %580 = vmatprep.subr.mxu0 0.0
        %581 = vmatpush1.msra.mxu0 0.0
        %582 = vmatprep.subr.mxu0 0.0
        %583 = vmatpush1.msra.mxu0 0.0
        %584 = vmatprep.subr.mxu0 0.0
        %585 = vmatpush1.msra.mxu0 0.0
        %586 = vmatprep.subr.mxu0 0.0
        %587 = vmatpush1.msra.mxu0 0.0
        %588 = vmatprep.subr.mxu0 0.0
        %589 = vmatpush1.msra.mxu0 0.0
        %590 = vmatprep.subr.mxu0 0.0
        %591 = vmatpush1.msra.mxu0 %v567
        %592 = vmatprep.subr.mxu0 0.0
        %593 = vmatpush1.msra.mxu0 %v566
        %594 = vmatprep.subr.mxu0 0.0
        %595 = vmatpush1.msra.mxu0 %v565
        %596 = vmatprep.subr.mxu0 0.0
        %597 = vmatpush1.msra.mxu0 %v564
        %598 = vmatprep.subr.mxu0 0.0
        %599 = vmatpush1.msra.mxu0 %v563
        %600 = vmatprep.subr.mxu0 0.0
        %601 = vmatpush1.msra.mxu0 %v562
        %602 = vmatprep.subr.mxu0 0.0
        %603 = vmatpush1.msra.mxu0 %v561
        %604 = vmatprep.subr.mxu0 0.0
        %605 = vmatpush1.msra.mxu0 %v560
        %606 = vmatprep.subr.mxu0 0.0
        %607 = vmatpush2.msra.mxu0 0.0
        %608 = vmatprep.subr.mxu0 0.0
        %609 = vmatpush2.msra.mxu0 0.0
        %610 = vmatprep.subr.mxu0 0.0
        %611 = vmatpush2.msra.mxu0 0.0
        %612 = vmatprep.subr.mxu0 0.0
        %613 = vmatpush2.msra.mxu0 0.0
        %614 = vmatprep.subr.mxu0 0.0
        %615 = vmatpush2.msra.mxu0 0.0
        %616 = vmatprep.subr.mxu0 0.0
        %617 = vmatpush2.msra.mxu0 0.0
        %618 = vmatprep.subr.mxu0 0.0
        %619 = vmatpush2.msra.mxu0 0.0
        %620 = vmatprep.subr.mxu0 0.0
        %621 = vmatpush2.msra.mxu0 0.0
        %622 = vmatprep.subr.mxu0 0.0
        %623 = vmatpush2.msra.mxu0 0.0
        %624 = vmatprep.subr.mxu0 0.0
        %625 = vmatpush2.msra.mxu0 0.0
        %626 = vmatprep.subr.mxu0 0.0
        %627 = vmatpush2.msra.mxu0 0.0
        %628 = vmatprep.subr.mxu0 0.0
        %629 = vmatpush2.msra.mxu0 0.0
        %630 = vmatprep.subr.mxu0 0.0
        %631 = vmatpush2.msra.mxu0 0.0
        %632 = vmatprep.subr.mxu0 0.0
        %633 = vmatpush2.msra.mxu0 0.0
        %634 = vmatprep.subr.mxu0 0.0
        %635 = vmatpush2.msra.mxu0 0.0
        %636 = vmatprep.subr.mxu0 0.0
        %637 = vmatpush2.msra.mxu0 0.0
        %638 = vmatprep.mubr.f32.mxu0 0.0
        %639 = vmatmul.mubr.f32.gmra.mxu0 %v569
        %v640 = vpop.f32.mrf.mxu0
        %v641 = vadd.f32 0.0, %v640
        %v642 = vpop.f32.mrf.mxu0
        %643 = vmatprep.mubr.f32.mxu0 0.0
        %644 = vmatmul.mubr.f32.gmra.mxu0 %v572
        %v645 = vpop.f32.mrf.mxu0
        %v646 = vadd.f32 0.0, %v645
        %v647 = vpop.f32.mrf.mxu0
        %648 = vdwg.mxu0
        %v649 = vadd.f32 %v555, %v641
        %v650 = vadd.f32 %v556, %v646
        %v651 = vsel %vm379, %v649, 0.0
        %652 = vadd.xlane.f32.xlu0 %v651
        %v653 = vpop.xlane.xlu0 %652
        %v654 = vsel %vm379, %v650, 0.0
        %655 = vadd.xlane.f32.xlu0 %v654
        %v656 = vpop.xlane.xlu0 %655
        %v657 = vrcp.pop 64.0
        %v658 = vmul.f32 %v653, %v657
        %v659 = vmul.f32 %v656, %v657
        %v660 = vsub.f32 %v649, %v658
        %v661 = vsub.f32 %v650, %v659
        %v662 = vmul.f32 %v660, %v660
        %v663 = vmul.f32 %v661, %v661
        %v664 = vsel %vm379, %v662, 0.0
        %665 = vadd.xlane.f32.xlu0 %v664
        %v666 = vpop.xlane.xlu0 %665
        %v667 = vsel %vm379, %v663, 0.0
        %668 = vadd.xlane.f32.xlu0 %v667
        %v669 = vpop.xlane.xlu0 %668
        %v670 = vmul.f32 %v666, %v657
        %v671 = vmul.f32 %v669, %v657
        %v672 = vadd.f32 %v670, 1e-08
        %v673 = vadd.f32 %v671, 1e-08
        %v674 = vrsqrt.pop %v672
        %v675 = vrsqrt.pop %v673
        %v676 = vmul.f32 %v660, %v674
        %v677 = vmul.f32 %v661, %v675
        %v678 = vld [vmem:[%s3] sm:$0x1]
        %v680 = vlaneseq
        %v681 = vshrl.u32 %v680, 7
        %v682 = vsub.s32 0, %v681
        %v683 = vrot.slane %v678, %v682
        %v685 = vmul.f32 %v676, %v683
        %v686 = vmul.f32 %v677, %v683
        %v687 = vld [vmem:[%s4] sm:$0x1]
        %v689 = vlaneseq
        %v690 = vshrl.u32 %v689, 7
        %v691 = vsub.s32 0, %v690
        %v692 = vrot.slane %v687, %v691
        %v694 = vadd.f32 %v685, %v692
        %v695 = vadd.f32 %v686, %v692
        %v696 = vmax.f32 %v694, 0.0
        %v697 = vmax.f32 %v695, 0.0
        %698 = vst.msk [vmem:[#allocation2] sm:$0xff] %vm379, 0.0
        %699 = vst.msk [vmem:[#allocation2 + $0x8] sm:$0xff] %vm379, %v696
        %700 = vst.msk [vmem:[#allocation2 + $0x10] sm:$0xff] %vm379, %v697
        %v701 = vld [vmem:[%s6] sm:$0x1]
        %v703 = vlaneseq
        %v704 = vshrl.u32 %v703, 7
        %v705 = vsub.s32 0, %v704
        %v706 = vrot.slane %v701, %v705
        %v708 = vadd.f32 %v706, 0.0
        %v709 = vld [vmem:[#allocation2] sm:$0xff]
        %v710 = vld [vmem:[#allocation2 + $0x8] sm:$0xff]
        %v711 = vld [vmem:[#allocation6] sm:$0xff]
        %v712 = vld [vmem:[#allocation6 + $0x8] sm:$0xff]
        %v713 = vld [vmem:[#allocation6 + $0x10] sm:$0xff]
        %v714 = vld [vmem:[#allocation6 + $0x18] sm:$0xff]
        %v715 = vld [vmem:[#allocation6 + $0x20] sm:$0xff]
        %v716 = vld [vmem:[#allocation6 + $0x28] sm:$0xff]
        %v717 = vld [vmem:[#allocation6 + $0x30] sm:$0xff]
        %v718 = vld [vmem:[#allocation6 + $0x38] sm:$0xff]
        %v720 = vsel %vm379, %v709, 0
        %v723 = vsel %vm379, %v710, 0
        %725 = vmatprep.subr.mxu0 0.0
        %726 = vmatpush1.msra.mxu0 0.0
        %727 = vmatprep.subr.mxu0 0.0
        %728 = vmatpush1.msra.mxu0 0.0
        %729 = vmatprep.subr.mxu0 0.0
        %730 = vmatpush1.msra.mxu0 0.0
        %731 = vmatprep.subr.mxu0 0.0
        %732 = vmatpush1.msra.mxu0 0.0
        %733 = vmatprep.subr.mxu0 0.0
        %734 = vmatpush1.msra.mxu0 0.0
        %735 = vmatprep.subr.mxu0 0.0
        %736 = vmatpush1.msra.mxu0 0.0
        %737 = vmatprep.subr.mxu0 0.0
        %738 = vmatpush1.msra.mxu0 0.0
        %739 = vmatprep.subr.mxu0 0.0
        %740 = vmatpush1.msra.mxu0 0.0
        %741 = vmatprep.subr.mxu0 0.0
        %742 = vmatpush1.msra.mxu0 %v718
        %743 = vmatprep.subr.mxu0 0.0
        %744 = vmatpush1.msra.mxu0 %v717
        %745 = vmatprep.subr.mxu0 0.0
        %746 = vmatpush1.msra.mxu0 %v716
        %747 = vmatprep.subr.mxu0 0.0
        %748 = vmatpush1.msra.mxu0 %v715
        %749 = vmatprep.subr.mxu0 0.0
        %750 = vmatpush1.msra.mxu0 %v714
        %751 = vmatprep.subr.mxu0 0.0
        %752 = vmatpush1.msra.mxu0 %v713
        %753 = vmatprep.subr.mxu0 0.0
        %754 = vmatpush1.msra.mxu0 %v712
        %755 = vmatprep.subr.mxu0 0.0
        %756 = vmatpush1.msra.mxu0 %v711
        %757 = vmatprep.subr.mxu0 0.0
        %758 = vmatpush2.msra.mxu0 0.0
        %759 = vmatprep.subr.mxu0 0.0
        %760 = vmatpush2.msra.mxu0 0.0
        %761 = vmatprep.subr.mxu0 0.0
        %762 = vmatpush2.msra.mxu0 0.0
        %763 = vmatprep.subr.mxu0 0.0
        %764 = vmatpush2.msra.mxu0 0.0
        %765 = vmatprep.subr.mxu0 0.0
        %766 = vmatpush2.msra.mxu0 0.0
        %767 = vmatprep.subr.mxu0 0.0
        %768 = vmatpush2.msra.mxu0 0.0
        %769 = vmatprep.subr.mxu0 0.0
        %770 = vmatpush2.msra.mxu0 0.0
        %771 = vmatprep.subr.mxu0 0.0
        %772 = vmatpush2.msra.mxu0 0.0
        %773 = vmatprep.subr.mxu0 0.0
        %774 = vmatpush2.msra.mxu0 0.0
        %775 = vmatprep.subr.mxu0 0.0
        %776 = vmatpush2.msra.mxu0 0.0
        %777 = vmatprep.subr.mxu0 0.0
        %778 = vmatpush2.msra.mxu0 0.0
        %779 = vmatprep.subr.mxu0 0.0
        %780 = vmatpush2.msra.mxu0 0.0
        %781 = vmatprep.subr.mxu0 0.0
        %782 = vmatpush2.msra.mxu0 0.0
        %783 = vmatprep.subr.mxu0 0.0
        %784 = vmatpush2.msra.mxu0 0.0
        %785 = vmatprep.subr.mxu0 0.0
        %786 = vmatpush2.msra.mxu0 0.0
        %787 = vmatprep.subr.mxu0 0.0
        %788 = vmatpush2.msra.mxu0 0.0
        %789 = vmatprep.mubr.f32.mxu0 0.0
        %790 = vmatmul.mubr.f32.gmra.mxu0 %v720
        %v791 = vpop.f32.mrf.mxu0
        %v792 = vadd.f32 0.0, %v791
        %v793 = vpop.f32.mrf.mxu0
        %794 = vmatprep.mubr.f32.mxu0 0.0
        %795 = vmatmul.mubr.f32.gmra.mxu0 %v723
        %v796 = vpop.f32.mrf.mxu0
        %v797 = vadd.f32 0.0, %v796
        %v798 = vpop.f32.mrf.mxu0
        %799 = vdwg.mxu0
        %v800 = vadd.f32 %v708, %v792
        %v801 = vadd.f32 %v708, %v797
        %v802 = vld [vmem:[#allocation2 + $0x4] sm:$0xff]
        %v803 = vld [vmem:[#allocation2 + $0xc] sm:$0xff]
        %s804 = scalar_lea.vmem [#allocation6], 64
        %v805 = vld [vmem:[%s804] sm:$0xff]
        %v806 = vld [vmem:[%s804 + $0x8] sm:$0xff]
        %v807 = vld [vmem:[%s804 + $0x10] sm:$0xff]
        %v808 = vld [vmem:[%s804 + $0x18] sm:$0xff]
        %v809 = vld [vmem:[%s804 + $0x20] sm:$0xff]
        %v810 = vld [vmem:[%s804 + $0x28] sm:$0xff]
        %v811 = vld [vmem:[%s804 + $0x30] sm:$0xff]
        %v812 = vld [vmem:[%s804 + $0x38] sm:$0xff]
        %v814 = vsel %vm379, %v802, 0
        %v817 = vsel %vm379, %v803, 0
        %819 = vmatprep.subr.mxu0 0.0
        %820 = vmatpush1.msra.mxu0 0.0
        %821 = vmatprep.subr.mxu0 0.0
        %822 = vmatpush1.msra.mxu0 0.0
        %823 = vmatprep.subr.mxu0 0.0
        %824 = vmatpush1.msra.mxu0 0.0
        %825 = vmatprep.subr.mxu0 0.0
        %826 = vmatpush1.msra.mxu0 0.0
        %827 = vmatprep.subr.mxu0 0.0
        %828 = vmatpush1.msra.mxu0 0.0
        %829 = vmatprep.subr.mxu0 0.0
        %830 = vmatpush1.msra.mxu0 0.0
        %831 = vmatprep.subr.mxu0 0.0
        %832 = vmatpush1.msra.mxu0 0.0
        %833 = vmatprep.subr.mxu0 0.0
        %834 = vmatpush1.msra.mxu0 0.0
        %835 = vmatprep.subr.mxu0 0.0
        %836 = vmatpush1.msra.mxu0 %v812
        %837 = vmatprep.subr.mxu0 0.0
        %838 = vmatpush1.msra.mxu0 %v811
        %839 = vmatprep.subr.mxu0 0.0
        %840 = vmatpush1.msra.mxu0 %v810
        %841 = vmatprep.subr.mxu0 0.0
        %842 = vmatpush1.msra.mxu0 %v809
        %843 = vmatprep.subr.mxu0 0.0
        %844 = vmatpush1.msra.mxu0 %v808
        %845 = vmatprep.subr.mxu0 0.0
        %846 = vmatpush1.msra.mxu0 %v807
        %847 = vmatprep.subr.mxu0 0.0
        %848 = vmatpush1.msra.mxu0 %v806
        %849 = vmatprep.subr.mxu0 0.0
        %850 = vmatpush1.msra.mxu0 %v805
        %851 = vmatprep.subr.mxu0 0.0
        %852 = vmatpush2.msra.mxu0 0.0
        %853 = vmatprep.subr.mxu0 0.0
        %854 = vmatpush2.msra.mxu0 0.0
        %855 = vmatprep.subr.mxu0 0.0
        %856 = vmatpush2.msra.mxu0 0.0
        %857 = vmatprep.subr.mxu0 0.0
        %858 = vmatpush2.msra.mxu0 0.0
        %859 = vmatprep.subr.mxu0 0.0
        %860 = vmatpush2.msra.mxu0 0.0
        %861 = vmatprep.subr.mxu0 0.0
        %862 = vmatpush2.msra.mxu0 0.0
        %863 = vmatprep.subr.mxu0 0.0
        %864 = vmatpush2.msra.mxu0 0.0
        %865 = vmatprep.subr.mxu0 0.0
        %866 = vmatpush2.msra.mxu0 0.0
        %867 = vmatprep.subr.mxu0 0.0
        %868 = vmatpush2.msra.mxu0 0.0
        %869 = vmatprep.subr.mxu0 0.0
        %870 = vmatpush2.msra.mxu0 0.0
        %871 = vmatprep.subr.mxu0 0.0
        %872 = vmatpush2.msra.mxu0 0.0
        %873 = vmatprep.subr.mxu0 0.0
        %874 = vmatpush2.msra.mxu0 0.0
        %875 = vmatprep.subr.mxu0 0.0
        %876 = vmatpush2.msra.mxu0 0.0
        %877 = vmatprep.subr.mxu0 0.0
        %878 = vmatpush2.msra.mxu0 0.0
        %879 = vmatprep.subr.mxu0 0.0
        %880 = vmatpush2.msra.mxu0 0.0
        %881 = vmatprep.subr.mxu0 0.0
        %882 = vmatpush2.msra.mxu0 0.0
        %883 = vmatprep.mubr.f32.mxu0 0.0
        %884 = vmatmul.mubr.f32.gmra.mxu0 %v814
        %v885 = vpop.f32.mrf.mxu0
        %v886 = vadd.f32 0.0, %v885
        %v887 = vpop.f32.mrf.mxu0
        %888 = vmatprep.mubr.f32.mxu0 0.0
        %889 = vmatmul.mubr.f32.gmra.mxu0 %v817
        %v890 = vpop.f32.mrf.mxu0
        %v891 = vadd.f32 0.0, %v890
        %v892 = vpop.f32.mrf.mxu0
        %893 = vdwg.mxu0
        %v894 = vadd.f32 %v800, %v886
        %v895 = vadd.f32 %v801, %v891
        %v896 = vld [vmem:[#allocation2 + $0x8] sm:$0xff]
        %v897 = vld [vmem:[#allocation2 + $0x10] sm:$0xff]
        %s898 = scalar_lea.vmem [#allocation6], 128
        %v899 = vld [vmem:[%s898] sm:$0xff]
        %v900 = vld [vmem:[%s898 + $0x8] sm:$0xff]
        %v901 = vld [vmem:[%s898 + $0x10] sm:$0xff]
        %v902 = vld [vmem:[%s898 + $0x18] sm:$0xff]
        %v903 = vld [vmem:[%s898 + $0x20] sm:$0xff]
        %v904 = vld [vmem:[%s898 + $0x28] sm:$0xff]
        %v905 = vld [vmem:[%s898 + $0x30] sm:$0xff]
        %v906 = vld [vmem:[%s898 + $0x38] sm:$0xff]
        %v908 = vsel %vm379, %v896, 0
        %v911 = vsel %vm379, %v897, 0
        %913 = vmatprep.subr.mxu0 0.0
        %914 = vmatpush1.msra.mxu0 0.0
        %915 = vmatprep.subr.mxu0 0.0
        %916 = vmatpush1.msra.mxu0 0.0
        %917 = vmatprep.subr.mxu0 0.0
        %918 = vmatpush1.msra.mxu0 0.0
        %919 = vmatprep.subr.mxu0 0.0
        %920 = vmatpush1.msra.mxu0 0.0
        %921 = vmatprep.subr.mxu0 0.0
        %922 = vmatpush1.msra.mxu0 0.0
        %923 = vmatprep.subr.mxu0 0.0
        %924 = vmatpush1.msra.mxu0 0.0
        %925 = vmatprep.subr.mxu0 0.0
        %926 = vmatpush1.msra.mxu0 0.0
        %927 = vmatprep.subr.mxu0 0.0
        %928 = vmatpush1.msra.mxu0 0.0
        %929 = vmatprep.subr.mxu0 0.0
        %930 = vmatpush1.msra.mxu0 %v906
        %931 = vmatprep.subr.mxu0 0.0
        %932 = vmatpush1.msra.mxu0 %v905
        %933 = vmatprep.subr.mxu0 0.0
        %934 = vmatpush1.msra.mxu0 %v904
        %935 = vmatprep.subr.mxu0 0.0
        %936 = vmatpush1.msra.mxu0 %v903
        %937 = vmatprep.subr.mxu0 0.0
        %938 = vmatpush1.msra.mxu0 %v902
        %939 = vmatprep.subr.mxu0 0.0
        %940 = vmatpush1.msra.mxu0 %v901
        %941 = vmatprep.subr.mxu0 0.0
        %942 = vmatpush1.msra.mxu0 %v900
        %943 = vmatprep.subr.mxu0 0.0
        %944 = vmatpush1.msra.mxu0 %v899
        %945 = vmatprep.subr.mxu0 0.0
        %946 = vmatpush2.msra.mxu0 0.0
        %947 = vmatprep.subr.mxu0 0.0
        %948 = vmatpush2.msra.mxu0 0.0
        %949 = vmatprep.subr.mxu0 0.0
        %950 = vmatpush2.msra.mxu0 0.0
        %951 = vmatprep.subr.mxu0 0.0
        %952 = vmatpush2.msra.mxu0 0.0
        %953 = vmatprep.subr.mxu0 0.0
        %954 = vmatpush2.msra.mxu0 0.0
        %955 = vmatprep.subr.mxu0 0.0
        %956 = vmatpush2.msra.mxu0 0.0
        %957 = vmatprep.subr.mxu0 0.0
        %958 = vmatpush2.msra.mxu0 0.0
        %959 = vmatprep.subr.mxu0 0.0
        %960 = vmatpush2.msra.mxu0 0.0
        %961 = vmatprep.subr.mxu0 0.0
        %962 = vmatpush2.msra.mxu0 0.0
        %963 = vmatprep.subr.mxu0 0.0
        %964 = vmatpush2.msra.mxu0 0.0
        %965 = vmatprep.subr.mxu0 0.0
        %966 = vmatpush2.msra.mxu0 0.0
        %967 = vmatprep.subr.mxu0 0.0
        %968 = vmatpush2.msra.mxu0 0.0
        %969 = vmatprep.subr.mxu0 0.0
        %970 = vmatpush2.msra.mxu0 0.0
        %971 = vmatprep.subr.mxu0 0.0
        %972 = vmatpush2.msra.mxu0 0.0
        %973 = vmatprep.subr.mxu0 0.0
        %974 = vmatpush2.msra.mxu0 0.0
        %975 = vmatprep.subr.mxu0 0.0
        %976 = vmatpush2.msra.mxu0 0.0
        %977 = vmatprep.mubr.f32.mxu0 0.0
        %978 = vmatmul.mubr.f32.gmra.mxu0 %v908
        %v979 = vpop.f32.mrf.mxu0
        %v980 = vadd.f32 0.0, %v979
        %v981 = vpop.f32.mrf.mxu0
        %982 = vmatprep.mubr.f32.mxu0 0.0
        %983 = vmatmul.mubr.f32.gmra.mxu0 %v911
        %v984 = vpop.f32.mrf.mxu0
        %v985 = vadd.f32 0.0, %v984
        %v986 = vpop.f32.mrf.mxu0
        %987 = vdwg.mxu0
        %v988 = vadd.f32 %v894, %v980
        %v989 = vadd.f32 %v895, %v985
        %v990 = vsel %vm379, %v988, 0.0
        %991 = vadd.xlane.f32.xlu0 %v990
        %v992 = vpop.xlane.xlu0 %991
        %v993 = vsel %vm379, %v989, 0.0
        %994 = vadd.xlane.f32.xlu0 %v993
        %v995 = vpop.xlane.xlu0 %994
        %v996 = vmul.f32 %v992, %v657
        %v997 = vmul.f32 %v995, %v657
        %v998 = vsub.f32 %v988, %v996
        %v999 = vsub.f32 %v989, %v997
        %v1000 = vmul.f32 %v998, %v998
        %v1001 = vmul.f32 %v999, %v999
        %v1002 = vsel %vm379, %v1000, 0.0
        %1003 = vadd.xlane.f32.xlu0 %v1002
        %v1004 = vpop.xlane.xlu0 %1003
        %v1005 = vsel %vm379, %v1001, 0.0
        %1006 = vadd.xlane.f32.xlu0 %v1005
        %v1007 = vpop.xlane.xlu0 %1006
        %v1008 = vmul.f32 %v1004, %v657
        %v1009 = vmul.f32 %v1007, %v657
        %v1010 = vadd.f32 %v1008, 1e-08
        %v1011 = vadd.f32 %v1009, 1e-08
        %v1012 = vrsqrt.pop %v1010
        %v1013 = vrsqrt.pop %v1011
        %v1014 = vmul.f32 %v998, %v1012
        %v1015 = vmul.f32 %v999, %v1013
        %v1016 = vld [vmem:[%s7] sm:$0x1]
        %v1018 = vlaneseq
        %v1019 = vshrl.u32 %v1018, 7
        %v1020 = vsub.s32 0, %v1019
        %v1021 = vrot.slane %v1016, %v1020
        %v1023 = vmul.f32 %v1014, %v1021
        %v1024 = vmul.f32 %v1015, %v1021
        %v1025 = vld [vmem:[%s8] sm:$0x1]
        %v1027 = vlaneseq
        %v1028 = vshrl.u32 %v1027, 7
        %v1029 = vsub.s32 0, %v1028
        %v1030 = vrot.slane %v1025, %v1029
        %v1032 = vadd.f32 %v1023, %v1030
        %v1033 = vadd.f32 %v1024, %v1030
        %v1034 = vmax.f32 %v1032, 0.0
        %v1035 = vmax.f32 %v1033, 0.0
        %v1036 = vld [vmem:[%s360 + $0x4] sm:$0xff]
        %v1037 = vld [vmem:[%s360 + $0xc] sm:$0xff]
        %v1038 = vadd.f32 %v1034, %v1036
        %v1039 = vadd.f32 %v1035, %v1037
        %1040 = vst.msk [vmem:[%s355] sm:$0xff] %vm379, %v1038
        %1041 = vst.msk [vmem:[%s355 + $0x8] sm:$0xff] %vm379, %v1039
        %s1042 = sand.u32 %s227, 1
        %s1043 = scalar_lea.sflag [#allocation5], %s1042
        %s1044 = sand.u32 %s227, 1
        %s1045 = smul.addr %s1044, 16
        %s1046 = scalar_lea.vmem [#allocation8], %s1045
        // Predicated region
        $region65: #{tpu_custom_call.1} parent=55 // pred_check
          %p1047 = pneg %p237
        $region66: #{tpu_custom_call.1} parent=55 // pred_check_branch
          %1049 = sbr.rel (%p1047) target = $region68
        $region67: #{tpu_custom_call.1} parent=55 // pred_region
          %s1051 = ssub.s32 256, 256
          %1052 = vsyncadd %s1043, %s1051
          %s1053 = smul.addr %s25, 2
          %s1054 = smul.addr %s1053, 128
          %s1055 = scalar_lea.hbm %s9, %s1054
          %s1056 = sshll.u32 %s1046, 4
          %s1057 = int_to_ptr.vmem [resolvable:$true] %s1056
          %1062 = dma.vmem_to_hbm [thread:$0]  %s1057, 256, %s1055, %s1043, 128, 128, 8
        $region68: #{tpu_custom_call.1} parent=55 // pred_fallthru
          _
      $region56: #{tpu_custom_call.1} parent=5 // pred_fallthru
        _
      %p1063 = scmp.le.s32.totalorder 2, %s20
      // Predicated region
      $region69: #{tpu_custom_call.1} parent=5 // pred_check
        %p1064 = pneg %p1063
      $region70: #{tpu_custom_call.1} parent=5 // pred_check_branch
        %1066 = sbr.rel (%p1064) target = $region72
      $region71: #{tpu_custom_call.1} parent=5 // pred_region
        %s1067 = ssub.s32 %s20, 2
        // Predicated region
        $region73: #{tpu_custom_call.1} parent=71 // pred_check
          %p1068 = pneg %p243
        $region74: #{tpu_custom_call.1} parent=71 // pred_check_branch
          %1070 = sbr.rel (%p1068) target = $region76
        $region75: #{tpu_custom_call.1} parent=71 // pred_region
          %s1071 = sand.u32 %s228, 1
          %s1072 = scalar_lea.sflag [#allocation5], %s1071
          %s1073 = sand.u32 %s228, 1
          %s1074 = smul.addr %s1073, 16
          %s1075 = scalar_lea.vmem [#allocation8], %s1074
          %1076 = dma.done %s1072, 256
        $region76: #{tpu_custom_call.1} parent=71 // pred_fallthru
          _
      $region72: #{tpu_custom_call.1} parent=5 // pred_fallthru
        _
    $region6: #{tpu_custom_call.1} parent=1 // loop_footer
      %s24 = sadd.s32 1, %s20
    $region7: #{tpu_custom_call.1} parent=1 // loop_footer_branch
      %19 = sbr.rel target = $region3
    $region8: #{tpu_custom_call.1} parent=1 // loop_exit
      _
    %1077 = vsyncpa [#allocation4], 1
    %s1078 = scalar_lea.sflag [#allocation4], 1
    %1079 = vsyncpa %s1078, 1
    %1080 = vsyncpa [#allocation7], 1
    %1081 = vsyncpa [#allocation5], 1
    %s1082 = scalar_lea.sflag [#allocation5], 1
    %1083 = vsyncpa %s1082, 1

</llo_original>
